<compile_context>
chip_gen: v5e
topology: v5e:2x2
jax: 0.10.0
libtpu: 0.0.40
codegen_flags: <defaults>
</compile_context>

<pallas_src>
import math

import jax
import jax.numpy as jnp
from jax.experimental import pallas as pl
from jax.experimental.pallas import tpu as pltpu


# Config consistent with the module (config.hidden_size /
# config.transformer['mlp_dim'] / dropout_rate).
CFG = dict(hidden_size=32, mlp_dim=128, dropout_rate=0.1)

_LANES = 128
_MAX_ROW_TILE = 512   # folded rows per grid step; >=85% of HBM roofline


def _erf(x):
    # Abramowitz & Stegun 7.1.26 rational approximation (|err| < 1.5e-7),
    # with the divide replaced by an EUP approx reciprocal (adds ~1e-4 err,
    # far below bf16 rounding of the matmul inputs).
    a1, a2, a3, a4, a5 = (0.254829592, -0.284496736, 1.421413741,
                          -1.453152027, 1.061405429)
    p = 0.3275911
    ax = jnp.abs(x)
    t = pl.reciprocal(1.0 + p * ax, approx=True)
    poly = ((((a5 * t + a4) * t + a3) * t + a2) * t + a1) * t
    v = 1.0 - poly * jnp.exp(-ax * ax)
    return jnp.where(x >= 0.0, v, -v)


def _gelu_exact(x):
    # erf-form GELU (torch.nn.functional.gelu default, approximate='none').
    return 0.5 * x * (1.0 + _erf(x * (1.0 / math.sqrt(2.0))))


def _mlp_kernel(x_ref, w1_ref, b1_ref, w2_ref, b2_ref, o_ref):
    # bf16 cast of the activations happens in-kernel (no wrapper HBM pass).
    x = x_ref[...].astype(jnp.bfloat16)
    # fc1 (bf16 MXU, f32 acc) -> +bias -> exact GELU in f32
    h = jnp.dot(x, w1_ref[...], preferred_element_type=jnp.float32)
    h = _gelu_exact(h + b1_ref[...])
    # fc2 (bf16 MXU, f32 acc) -> +bias
    y = jnp.dot(h.astype(jnp.bfloat16), w2_ref[...],
                preferred_element_type=jnp.float32)
    o_ref[...] = (y + b2_ref[...]).astype(o_ref.dtype)


def mlp_forward(params, x):
    """Mlp.forward: fc2(dropout(gelu(fc1(x)))) with dropout == identity."""
    # TODO(synk): training-mode Dropout (p=CFG['dropout_rate']) is not applied;
    # this matches eval/inference semantics.
    orig_shape = x.shape
    D = orig_shape[-1]
    w1f, b1f, w2f, b2f = (params["w1f"], params["b1f"],
                          params["w2f"], params["b2f"])
    Din = w1f.shape[0]            # D * fold  (lane-dense folded input width)
    Dh = w1f.shape[1]             # mlp_dim * fold
    fold = Din // D

    x2 = x.reshape(-1, D)
    M = x2.shape[0]
    pad = (-M) % fold
    if pad:                       # rare ragged case; demo shapes hit pad == 0
        x2 = jnp.pad(x2, ((0, pad), (0, 0)))
    Mf = (M + pad) // fold
    xf = x2.reshape(Mf, Din)      # free row-major reshape -> lane-dense input

    TM = Mf if Mf <= _MAX_ROW_TILE else _MAX_ROW_TILE
    grid = (pl.cdiv(Mf, TM),)

    out = pl.pallas_call(
        _mlp_kernel,
        out_shape=jax.ShapeDtypeStruct((Mf, Din), x.dtype),
        grid_spec=pltpu.PrefetchScalarGridSpec(
            num_scalar_prefetch=0,
            grid=grid,
            in_specs=[
                pl.BlockSpec((TM, Din), lambda i: (i, 0)),   # activations tile
                pl.BlockSpec((Din, Dh), lambda i: (0, 0)),   # fc1 weight (bdiag)
                pl.BlockSpec((1, Dh), lambda i: (0, 0)),     # fc1 bias (tiled)
                pl.BlockSpec((Dh, Din), lambda i: (0, 0)),   # fc2 weight (bdiag)
                pl.BlockSpec((1, Din), lambda i: (0, 0)),    # fc2 bias (tiled)
            ],
            out_specs=pl.BlockSpec((TM, Din), lambda i: (i, 0)),
        ),
        compiler_params=pltpu.CompilerParams(
            dimension_semantics=("parallel",)),
    )(xf, w1f, b1f, w2f, b2f)

    out = out.reshape(Mf * fold, D)
    if pad:
        out = out[:M]
    return out.reshape(orig_shape)


def _block_diag(w, fold):
    """`fold` copies of (in, out) `w` on the diagonal -> (in*fold, out*fold)."""
    if fold == 1:
        return w
    din, dout = w.shape
    out = jnp.zeros((din * fold, dout * fold), w.dtype)
    for i in range(fold):
        out = out.at[i * din:(i + 1) * din, i * dout:(i + 1) * dout].set(w)
    return out


def init_params(seed=0):
    """Matches Mlp._init_weights: xavier_uniform weights, N(0, 1e-6) biases."""
    key = jax.random.PRNGKey(seed)
    k1, k2, k3, k4 = jax.random.split(key, 4)
    D, F = CFG["hidden_size"], CFG["mlp_dim"]

    def xavier_uniform(k, fan_in, fan_out, shape):
        lim = math.sqrt(6.0 / (fan_in + fan_out))
        return jax.random.uniform(k, shape, jnp.float32, -lim, lim)

    # Raw weights stored pre-transposed to (in, out) layout; weights bf16
    # (MXU-native), biases f32 for the f32 epilogue.
    w1 = xavier_uniform(k1, D, F, (D, F)).astype(jnp.bfloat16)
    w2 = xavier_uniform(k2, F, D, (F, D)).astype(jnp.bfloat16)
    b1 = 1e-6 * jax.random.normal(k3, (1, F), jnp.float32)
    b2 = 1e-6 * jax.random.normal(k4, (1, D), jnp.float32)

    # Fold factor so the kernel-facing activation width is a full 128 lanes.
    fold = _LANES // D if (D < _LANES and _LANES % D == 0) else 1

    return dict(
        # raw (used by the pure-JAX reference check)
        w1=w1, b1=b1, w2=w2, b2=b2,
        # kernel-facing: block-diagonal folded weights + lane-tiled biases,
        # built once here so no per-call folding cost.
        w1f=_block_diag(w1, fold), b1f=jnp.tile(b1, (1, fold)),
        w2f=_block_diag(w2, fold), b2f=jnp.tile(b2, (1, fold)),
    )


if __name__ == "__main__":
    params = init_params(0)
    # tokens: (batch=2, seq=16, hidden=32)
    x = jax.random.normal(jax.random.PRNGKey(0),
                          (2, 16, CFG["hidden_size"]), jnp.float32)

    fwd = jax.jit(mlp_forward)
    y = fwd(params, x)
    jax.block_until_ready(y)
    assert y.shape == x.shape

    # Sanity check against a pure-JAX reference (same bf16 input rounding).
    def ref(p, xx):
        h = (xx.astype(jnp.bfloat16).astype(jnp.float32)
             @ p["w1"].astype(jnp.float32)) + p["b1"]
        h = jax.nn.gelu(h, approximate=False)
        return (h.astype(jnp.bfloat16).astype(jnp.float32)
                @ p["w2"].astype(jnp.float32)) + p["b2"]

    y_ref = ref(params, x.reshape(-1, CFG["hidden_size"])).reshape(x.shape)
    err = float(jnp.max(jnp.abs(y - y_ref)))
    assert err < 5e-2, f"max abs error {err}"
    print("KERNEL_OK")
</pallas_src>

<mosaic_0001>
module attributes {stable_mosaic.version = 11 : i64} {
  func.func @_mlp_kernel(%arg0: i32, %arg1: memref<8x128xf32, #tpu.memory_space<vmem>>, %arg2: memref<128x512xbf16, #tpu.memory_space<vmem>>, %arg3: memref<1x512xf32, #tpu.memory_space<vmem>>, %arg4: memref<512x128xbf16, #tpu.memory_space<vmem>>, %arg5: memref<1x128xf32, #tpu.memory_space<vmem>>, %arg6: memref<8x128xf32, #tpu.memory_space<vmem>>) attributes {dimension_semantics = [#tpu.dimension_semantics<parallel>], iteration_bounds = array<i64: 1>, scalar_prefetch = 0 : i64, scratch_operands = 0 : i64, tpu.core_type = #tpu.core_type<tc>, window_params = [{transform_indices = @transform_0, window_bounds = array<i64: 8, 128>}, {pipeline_mode = #tpu.pipeline_mode<synchronous>, transform_indices = @transform_1, window_bounds = array<i64: 128, 512>}, {pipeline_mode = #tpu.pipeline_mode<synchronous>, transform_indices = @transform_2, window_bounds = array<i64: 1, 512>}, {pipeline_mode = #tpu.pipeline_mode<synchronous>, transform_indices = @transform_3, window_bounds = array<i64: 512, 128>}, {pipeline_mode = #tpu.pipeline_mode<synchronous>, transform_indices = @transform_4, window_bounds = array<i64: 1, 128>}, {transform_indices = @transform_5, window_bounds = array<i64: 8, 128>}]} {
    %c0 = arith.constant 0 : index
    %c0_0 = arith.constant 0 : index
    %0 = vector.load %arg1[%c0, %c0_0] : memref<8x128xf32, #tpu.memory_space<vmem>>, vector<8x128xf32>
    %1 = arith.truncf %0 : vector<8x128xf32> to vector<8x128xbf16>
    %c0_1 = arith.constant 0 : index
    %c0_2 = arith.constant 0 : index
    %2 = vector.load %arg2[%c0_1, %c0_2] : memref<128x512xbf16, #tpu.memory_space<vmem>>, vector<128x512xbf16>
    %cst = arith.constant dense<0.000000e+00> : vector<8x512xf32>
    %3 = tpu.matmul %1, %2, %cst {dimension_numbers = #tpu.dot_dimension_numbers<[1], [0], [0], [1], [0, 0, 1, 1], [], []>} : vector<8x128xbf16>, vector<128x512xbf16>, vector<8x512xf32> -> vector<8x512xf32>
    %c0_3 = arith.constant 0 : index
    %c0_4 = arith.constant 0 : index
    %4 = vector.load %arg3[%c0_3, %c0_4] : memref<1x512xf32, #tpu.memory_space<vmem>>, vector<1x512xf32>
    %5 = vector.broadcast %4 : vector<1x512xf32> to vector<8x512xf32>
    %6 = arith.addf %3, %5 : vector<8x512xf32>
    %cst_5 = arith.constant 5.000000e-01 : f32
    %7 = vector.broadcast %cst_5 : f32 to vector<8x512xf32>
    %8 = arith.mulf %7, %6 : vector<8x512xf32>
    %cst_6 = arith.constant 0.707106769 : f32
    %9 = vector.broadcast %cst_6 : f32 to vector<8x512xf32>
    %10 = arith.mulf %6, %9 : vector<8x512xf32>
    %11 = math.absf %10 : vector<8x512xf32>
    %cst_7 = arith.constant 0.327591091 : f32
    %12 = vector.broadcast %cst_7 : f32 to vector<8x512xf32>
    %13 = arith.mulf %12, %11 : vector<8x512xf32>
    %cst_8 = arith.constant 1.000000e+00 : f32
    %14 = vector.broadcast %cst_8 : f32 to vector<8x512xf32>
    %15 = arith.addf %14, %13 : vector<8x512xf32>
    %16 = tpu.reciprocal %15 {approx = true} : vector<8x512xf32> -> vector<8x512xf32>
    %cst_9 = arith.constant 1.06140542 : f32
    %17 = vector.broadcast %cst_9 : f32 to vector<8x512xf32>
    %18 = arith.mulf %17, %16 : vector<8x512xf32>
    %cst_10 = arith.constant -1.45315206 : f32
    %19 = vector.broadcast %cst_10 : f32 to vector<8x512xf32>
    %20 = arith.addf %18, %19 : vector<8x512xf32>
    %21 = arith.mulf %20, %16 : vector<8x512xf32>
    %cst_11 = arith.constant 1.42141378 : f32
    %22 = vector.broadcast %cst_11 : f32 to vector<8x512xf32>
    %23 = arith.addf %21, %22 : vector<8x512xf32>
    %24 = arith.mulf %23, %16 : vector<8x512xf32>
    %cst_12 = arith.constant -0.284496725 : f32
    %25 = vector.broadcast %cst_12 : f32 to vector<8x512xf32>
    %26 = arith.addf %24, %25 : vector<8x512xf32>
    %27 = arith.mulf %26, %16 : vector<8x512xf32>
    %cst_13 = arith.constant 0.254829586 : f32
    %28 = vector.broadcast %cst_13 : f32 to vector<8x512xf32>
    %29 = arith.addf %27, %28 : vector<8x512xf32>
    %30 = arith.mulf %29, %16 : vector<8x512xf32>
    %cst_14 = arith.constant 0.000000e+00 : f32
    %31 = vector.broadcast %cst_14 : f32 to vector<8x512xf32>
    %32 = arith.subf %31, %11 : vector<8x512xf32>
    %33 = arith.mulf %32, %11 : vector<8x512xf32>
    %34 = math.exp %33 : vector<8x512xf32>
    %35 = arith.mulf %30, %34 : vector<8x512xf32>
    %cst_15 = arith.constant 1.000000e+00 : f32
    %36 = vector.broadcast %cst_15 : f32 to vector<8x512xf32>
    %37 = arith.subf %36, %35 : vector<8x512xf32>
    %cst_16 = arith.constant 0.000000e+00 : f32
    %38 = vector.broadcast %cst_16 : f32 to vector<8x512xf32>
    %39 = arith.cmpf oge, %10, %38 : vector<8x512xf32>
    %cst_17 = arith.constant 0.000000e+00 : f32
    %40 = vector.broadcast %cst_17 : f32 to vector<8x512xf32>
    %41 = arith.subf %40, %37 : vector<8x512xf32>
    %42 = arith.select %39, %37, %41 : vector<8x512xi1>, vector<8x512xf32>
    %cst_18 = arith.constant 1.000000e+00 : f32
    %43 = vector.broadcast %cst_18 : f32 to vector<8x512xf32>
    %44 = arith.addf %43, %42 : vector<8x512xf32>
    %45 = arith.mulf %8, %44 : vector<8x512xf32>
    %46 = arith.truncf %45 : vector<8x512xf32> to vector<8x512xbf16>
    %c0_19 = arith.constant 0 : index
    %c0_20 = arith.constant 0 : index
    %47 = vector.load %arg4[%c0_19, %c0_20] : memref<512x128xbf16, #tpu.memory_space<vmem>>, vector<512x128xbf16>
    %cst_21 = arith.constant dense<0.000000e+00> : vector<8x128xf32>
    %48 = tpu.matmul %46, %47, %cst_21 {dimension_numbers = #tpu.dot_dimension_numbers<[1], [0], [0], [1], [0, 0, 1, 1], [], []>} : vector<8x512xbf16>, vector<512x128xbf16>, vector<8x128xf32> -> vector<8x128xf32>
    %c0_22 = arith.constant 0 : index
    %c0_23 = arith.constant 0 : index
    %49 = vector.load %arg5[%c0_22, %c0_23] : memref<1x128xf32, #tpu.memory_space<vmem>>, vector<1x128xf32>
    %50 = vector.broadcast %49 : vector<1x128xf32> to vector<8x128xf32>
    %51 = arith.addf %48, %50 : vector<8x128xf32>
    %c0_24 = arith.constant 0 : index
    %c0_25 = arith.constant 0 : index
    %52 = vector.load %arg6[%c0_24, %c0_25] : memref<8x128xf32, #tpu.memory_space<vmem>>, vector<8x128xf32>
    tpu.vector_store %arg6[%c0_24, %c0_25], %51 {strides = array<i32>} : memref<8x128xf32, #tpu.memory_space<vmem>>, vector<8x128xf32>,
    return
  }
  func.func @transform_0(%arg0: i32) -> (i32, i32) {
    %c0_i32 = arith.constant 0 : i32
    %c0_i32_0 = arith.constant 0 : i32
    return %arg0, %c0_i32 : i32, i32
  }
  func.func @transform_1(%arg0: i32) -> (i32, i32) {
    %c0_i32 = arith.constant 0 : i32
    %c0_i32_0 = arith.constant 0 : i32
    %c0_i32_1 = arith.constant 0 : i32
    return %c0_i32, %c0_i32_0 : i32, i32
  }
  func.func @transform_2(%arg0: i32) -> (i32, i32) {
    %c0_i32 = arith.constant 0 : i32
    %c0_i32_0 = arith.constant 0 : i32
    %c0_i32_1 = arith.constant 0 : i32
    return %c0_i32, %c0_i32_0 : i32, i32
  }
  func.func @transform_3(%arg0: i32) -> (i32, i32) {
    %c0_i32 = arith.constant 0 : i32
    %c0_i32_0 = arith.constant 0 : i32
    %c0_i32_1 = arith.constant 0 : i32
    return %c0_i32, %c0_i32_0 : i32, i32
  }
  func.func @transform_4(%arg0: i32) -> (i32, i32) {
    %c0_i32 = arith.constant 0 : i32
    %c0_i32_0 = arith.constant 0 : i32
    %c0_i32_1 = arith.constant 0 : i32
    return %c0_i32, %c0_i32_0 : i32, i32
  }
  func.func @transform_5(%arg0: i32) -> (i32, i32) {
    %c0_i32 = arith.constant 0 : i32
    %c0_i32_0 = arith.constant 0 : i32
    return %arg0, %c0_i32 : i32, i32
  }
}

</mosaic_0001>

<llo_original>
// kernel: mlp_forward.1
$region0: #{mlp_forward.1}
  #allocation0 [shape = 'u32[]', space=smem, size = 0x4, offset = 0x4, fixed_abs, tag = 'smem constant byte address 0x4 - core index']
  #allocation1 [shape = 'u32[72,128]{1,0:T(1,128)}', space=vmem, size = 0x9000, scoped, tag = 'internal scratch']
  %s0 = inlined_call_operand.vmem [shape: f32[8,128], index: 0, kind: input, shape index: {}]
  %s1 = inlined_call_operand.hbm [shape: bf16[128,512], index: 1, kind: input, shape index: {}]
  %s2 = inlined_call_operand.vmem [shape: f32[1,512], index: 2, kind: input, shape index: {}]
  %s3 = inlined_call_operand.hbm [shape: bf16[512,128], index: 3, kind: input, shape index: {}]
  %s4 = inlined_call_operand.vmem [shape: f32[1,128], index: 4, kind: input, shape index: {}]
  %s5 = inlined_call_operand.vmem [shape: f32[8,128], index: 5, kind: output, shape index: {}]
  %s6 = sld [smem:[#allocation0]]
  $region38: #{mlp_forward.1} parent=0
    _
  %s8 = ssub.s32 1, %s6
  %s9 = scalar_select 0, %s8, %s6
  $region1: #{mlp_forward.1} parent=0
    #allocation2 [shape = 'u8[131072]{0}', space=vmem, size = 0x20000, scoped, tag = 'input window, operand 1, single buffered']
    #allocation3 [shape = 's32[1]{0}', space=sflag, size = 0x4, scoped, tag = 'scoped memory for mlp_forward.1']
    #allocation4 [shape = 'u8[131072]{0}', space=vmem, size = 0x20000, scoped, tag = 'input window, operand 3, single buffered']
    #allocation5 [shape = 's32[1]{0}', space=sflag, size = 0x4, scoped, tag = 'scoped memory for mlp_forward.1']
    %10 = vsyncpa [#allocation3], 0
    %11 = vsyncpa [#allocation5], 0
    // Predicated region
    $region2: #{mlp_forward.1} parent=1 // pred_check
      _
    $region3: #{mlp_forward.1} parent=1 // pred_check_branch
      %13 = sbr.rel (0) target = $region5
    $region4: #{mlp_forward.1} parent=1 // pred_region
      _
    $region5: #{mlp_forward.1} parent=1 // pred_fallthru
      _
    // Predicated region
    $region6: #{mlp_forward.1} parent=1 // pred_check
      _
    $region7: #{mlp_forward.1} parent=1 // pred_check_branch
      %15 = sbr.rel (0) target = $region9
    $region8: #{mlp_forward.1} parent=1 // pred_region
      %17 = vsyncadd [#allocation3], 0
      %s18 = sshll.u32 %s1, 4
      %s19 = int_to_ptr.hbm [resolvable:$true] %s18
      %s20 = sshll.u32 [#allocation2], 4
      %s21 = int_to_ptr.vmem [resolvable:$true] %s20
      %26 = dma.hbm_to_vmem [thread:$0]  %s19, 4096, %s21, [#allocation3], 256, 256, 16
    $region9: #{mlp_forward.1} parent=1 // pred_fallthru
      _
    // Predicated region
    $region10: #{mlp_forward.1} parent=1 // pred_check
      _
    $region11: #{mlp_forward.1} parent=1 // pred_check_branch
      %28 = sbr.rel (0) target = $region13
    $region12: #{mlp_forward.1} parent=1 // pred_region
      _
    $region13: #{mlp_forward.1} parent=1 // pred_fallthru
      _
    // Predicated region
    $region14: #{mlp_forward.1} parent=1 // pred_check
      _
    $region15: #{mlp_forward.1} parent=1 // pred_check_branch
      %30 = sbr.rel (0) target = $region17
    $region16: #{mlp_forward.1} parent=1 // pred_region
      %32 = vsyncadd [#allocation5], 0
      %s33 = sshll.u32 %s3, 4
      %s34 = int_to_ptr.hbm [resolvable:$true] %s33
      %s35 = sshll.u32 [#allocation4], 4
      %s36 = int_to_ptr.vmem [resolvable:$true] %s35
      %41 = dma.hbm_to_vmem [thread:$0]  %s34, 4096, %s36, [#allocation5], 64, 64, 4
    $region17: #{mlp_forward.1} parent=1 // pred_fallthru
      _
    // Predicated region
    $region18: #{mlp_forward.1} parent=1 // pred_check
      _
    $region19: #{mlp_forward.1} parent=1 // pred_check_branch
      %43 = sbr.rel (0) target = $region21
    $region20: #{mlp_forward.1} parent=1 // pred_region
      _
    $region21: #{mlp_forward.1} parent=1 // pred_fallthru
      _
    // Predicated region
    $region22: #{mlp_forward.1} parent=1 // pred_check
      _
    $region23: #{mlp_forward.1} parent=1 // pred_check_branch
      %45 = sbr.rel (0) target = $region25
    $region24: #{mlp_forward.1} parent=1 // pred_region
      %47 = dma.done [#allocation3], 4096
    $region25: #{mlp_forward.1} parent=1 // pred_fallthru
      _
    // Predicated region
    $region26: #{mlp_forward.1} parent=1 // pred_check
      _
    $region27: #{mlp_forward.1} parent=1 // pred_check_branch
      %49 = sbr.rel (0) target = $region29
    $region28: #{mlp_forward.1} parent=1 // pred_region
      %51 = dma.done [#allocation5], 4096
    $region29: #{mlp_forward.1} parent=1 // pred_fallthru
      _
    %v52 = vld [vmem:[%s0] sm:$0xff]
    %v53 = vpack.c.bf16 %v52, %v52
    %v54 = vld [vmem:[#allocation2] sm:$0xff]
    %v55 = vld [vmem:[#allocation2 + $0x8] sm:$0xff]
    %v56 = vld [vmem:[#allocation2 + $0x10] sm:$0xff]
    %v57 = vld [vmem:[#allocation2 + $0x18] sm:$0xff]
    %v58 = vld [vmem:[#allocation2 + $0x20] sm:$0xff]
    %v59 = vld [vmem:[#allocation2 + $0x28] sm:$0xff]
    %v60 = vld [vmem:[#allocation2 + $0x30] sm:$0xff]
    %v61 = vld [vmem:[#allocation2 + $0x38] sm:$0xff]
    %v62 = vld [vmem:[#allocation2 + $0x40] sm:$0xff]
    %v63 = vld [vmem:[#allocation2 + $0x48] sm:$0xff]
    %v64 = vld [vmem:[#allocation2 + $0x50] sm:$0xff]
    %v65 = vld [vmem:[#allocation2 + $0x58] sm:$0xff]
    %v66 = vld [vmem:[#allocation2 + $0x60] sm:$0xff]
    %v67 = vld [vmem:[#allocation2 + $0x68] sm:$0xff]
    %v68 = vld [vmem:[#allocation2 + $0x70] sm:$0xff]
    %v69 = vld [vmem:[#allocation2 + $0x78] sm:$0xff]
    %v70 = vld [vmem:[#allocation2 + $0x80] sm:$0xff]
    %v71 = vld [vmem:[#allocation2 + $0x88] sm:$0xff]
    %v72 = vld [vmem:[#allocation2 + $0x90] sm:$0xff]
    %v73 = vld [vmem:[#allocation2 + $0x98] sm:$0xff]
    %v74 = vld [vmem:[#allocation2 + $0xa0] sm:$0xff]
    %v75 = vld [vmem:[#allocation2 + $0xa8] sm:$0xff]
    %v76 = vld [vmem:[#allocation2 + $0xb0] sm:$0xff]
    %v77 = vld [vmem:[#allocation2 + $0xb8] sm:$0xff]
    %v78 = vld [vmem:[#allocation2 + $0xc0] sm:$0xff]
    %v79 = vld [vmem:[#allocation2 + $0xc8] sm:$0xff]
    %v80 = vld [vmem:[#allocation2 + $0xd0] sm:$0xff]
    %v81 = vld [vmem:[#allocation2 + $0xd8] sm:$0xff]
    %v82 = vld [vmem:[#allocation2 + $0xe0] sm:$0xff]
    %v83 = vld [vmem:[#allocation2 + $0xe8] sm:$0xff]
    %v84 = vld [vmem:[#allocation2 + $0xf0] sm:$0xff]
    %v85 = vld [vmem:[#allocation2 + $0xf8] sm:$0xff]
    %v86 = vld [vmem:[%s2] sm:$0xf]
    %v88 = vperm.slane %v86, 0
    %v89 = vperm.slane %v86, 1
    %v90 = vperm.slane %v86, 2
    %v91 = vperm.slane %v86, 3
    %v128 = vunpack.c.l.b16 %v54
    %v129 = vunpack.c.h.b16 %v54
    %v130 = vunpack.c.l.b16 %v55
    %v131 = vunpack.c.h.b16 %v55
    %v132 = vunpack.c.l.b16 %v56
    %v133 = vunpack.c.h.b16 %v56
    %v134 = vunpack.c.l.b16 %v57
    %v135 = vunpack.c.h.b16 %v57
    %v136 = vunpack.c.l.b16 %v58
    %v137 = vunpack.c.h.b16 %v58
    %v138 = vunpack.c.l.b16 %v59
    %v139 = vunpack.c.h.b16 %v59
    %v140 = vunpack.c.l.b16 %v60
    %v141 = vunpack.c.h.b16 %v60
    %v142 = vunpack.c.l.b16 %v61
    %v143 = vunpack.c.h.b16 %v61
    %v144 = vunpack.c.l.b16 %v62
    %v145 = vunpack.c.h.b16 %v62
    %v146 = vunpack.c.l.b16 %v63
    %v147 = vunpack.c.h.b16 %v63
    %v148 = vunpack.c.l.b16 %v64
    %v149 = vunpack.c.h.b16 %v64
    %v150 = vunpack.c.l.b16 %v65
    %v151 = vunpack.c.h.b16 %v65
    %v152 = vunpack.c.l.b16 %v66
    %v153 = vunpack.c.h.b16 %v66
    %v154 = vunpack.c.l.b16 %v67
    %v155 = vunpack.c.h.b16 %v67
    %v156 = vunpack.c.l.b16 %v68
    %v157 = vunpack.c.h.b16 %v68
    %v158 = vunpack.c.l.b16 %v69
    %v159 = vunpack.c.h.b16 %v69
    %v160 = vunpack.c.l.b16 %v70
    %v161 = vunpack.c.h.b16 %v70
    %v162 = vunpack.c.l.b16 %v71
    %v163 = vunpack.c.h.b16 %v71
    %v164 = vunpack.c.l.b16 %v72
    %v165 = vunpack.c.h.b16 %v72
    %v166 = vunpack.c.l.b16 %v73
    %v167 = vunpack.c.h.b16 %v73
    %v168 = vunpack.c.l.b16 %v74
    %v169 = vunpack.c.h.b16 %v74
    %v170 = vunpack.c.l.b16 %v75
    %v171 = vunpack.c.h.b16 %v75
    %v172 = vunpack.c.l.b16 %v76
    %v173 = vunpack.c.h.b16 %v76
    %v174 = vunpack.c.l.b16 %v77
    %v175 = vunpack.c.h.b16 %v77
    %v176 = vunpack.c.l.b16 %v78
    %v177 = vunpack.c.h.b16 %v78
    %v178 = vunpack.c.l.b16 %v79
    %v179 = vunpack.c.h.b16 %v79
    %v180 = vunpack.c.l.b16 %v80
    %v181 = vunpack.c.h.b16 %v80
    %v182 = vunpack.c.l.b16 %v81
    %v183 = vunpack.c.h.b16 %v81
    %v184 = vunpack.c.l.b16 %v82
    %v185 = vunpack.c.h.b16 %v82
    %v186 = vunpack.c.l.b16 %v83
    %v187 = vunpack.c.h.b16 %v83
    %v188 = vunpack.c.l.b16 %v84
    %v189 = vunpack.c.h.b16 %v84
    %v190 = vunpack.c.l.b16 %v85
    %v191 = vunpack.c.h.b16 %v85
    %v192 = vpack.c.b16 %v132, %v128
    %v193 = vpack.c.b16 %v133, %v129
    %v194 = vpack.c.b16 %v134, %v130
    %v195 = vpack.c.b16 %v135, %v131
    %v196 = vpack.c.b16 %v140, %v136
    %v197 = vpack.c.b16 %v141, %v137
    %v198 = vpack.c.b16 %v142, %v138
    %v199 = vpack.c.b16 %v143, %v139
    %v200 = vpack.c.b16 %v148, %v144
    %v201 = vpack.c.b16 %v149, %v145
    %v202 = vpack.c.b16 %v150, %v146
    %v203 = vpack.c.b16 %v151, %v147
    %v204 = vpack.c.b16 %v156, %v152
    %v205 = vpack.c.b16 %v157, %v153
    %v206 = vpack.c.b16 %v158, %v154
    %v207 = vpack.c.b16 %v159, %v155
    %v208 = vpack.c.b16 %v164, %v160
    %v209 = vpack.c.b16 %v165, %v161
    %v210 = vpack.c.b16 %v166, %v162
    %v211 = vpack.c.b16 %v167, %v163
    %v212 = vpack.c.b16 %v172, %v168
    %v213 = vpack.c.b16 %v173, %v169
    %v214 = vpack.c.b16 %v174, %v170
    %v215 = vpack.c.b16 %v175, %v171
    %v216 = vpack.c.b16 %v180, %v176
    %v217 = vpack.c.b16 %v181, %v177
    %v218 = vpack.c.b16 %v182, %v178
    %v219 = vpack.c.b16 %v183, %v179
    %v220 = vpack.c.b16 %v188, %v184
    %v221 = vpack.c.b16 %v189, %v185
    %v222 = vpack.c.b16 %v190, %v186
    %v223 = vpack.c.b16 %v191, %v187
    %256 = vmatpush.bf16.msra.mxu0 %v220
    %257 = vmatpush.bf16.msra.mxu0 %v216
    %258 = vmatpush.bf16.msra.mxu0 %v212
    %259 = vmatpush.bf16.msra.mxu0 %v208
    %260 = vmatpush.bf16.msra.mxu0 %v204
    %261 = vmatpush.bf16.msra.mxu0 %v200
    %262 = vmatpush.bf16.msra.mxu0 %v196
    %263 = vmatpush.bf16.msra.mxu0 %v192
    %264 = vmatmul.bf16.gmra.mxu0 %v53
    %v265 = vpop.f32.mrf.mxu0
    %v266 = vadd.f32 %v88, %v265
    %v267 = vpop.f32.mrf.mxu0
    %268 = vdwg.mxu0
    %269 = vmatpush.bf16.msra.mxu0 %v221
    %270 = vmatpush.bf16.msra.mxu0 %v217
    %271 = vmatpush.bf16.msra.mxu0 %v213
    %272 = vmatpush.bf16.msra.mxu0 %v209
    %273 = vmatpush.bf16.msra.mxu0 %v205
    %274 = vmatpush.bf16.msra.mxu0 %v201
    %275 = vmatpush.bf16.msra.mxu0 %v197
    %276 = vmatpush.bf16.msra.mxu0 %v193
    %277 = vmatmul.bf16.gmra.mxu0 %v53
    %v278 = vpop.f32.mrf.mxu0
    %v279 = vadd.f32 %v89, %v278
    %v280 = vpop.f32.mrf.mxu0
    %281 = vdwg.mxu0
    %282 = vmatpush.bf16.msra.mxu0 %v222
    %283 = vmatpush.bf16.msra.mxu0 %v218
    %284 = vmatpush.bf16.msra.mxu0 %v214
    %285 = vmatpush.bf16.msra.mxu0 %v210
    %286 = vmatpush.bf16.msra.mxu0 %v206
    %287 = vmatpush.bf16.msra.mxu0 %v202
    %288 = vmatpush.bf16.msra.mxu0 %v198
    %289 = vmatpush.bf16.msra.mxu0 %v194
    %290 = vmatmul.bf16.gmra.mxu0 %v53
    %v291 = vpop.f32.mrf.mxu0
    %v292 = vadd.f32 %v90, %v291
    %v293 = vpop.f32.mrf.mxu0
    %294 = vdwg.mxu0
    %295 = vmatpush.bf16.msra.mxu0 %v223
    %296 = vmatpush.bf16.msra.mxu0 %v219
    %297 = vmatpush.bf16.msra.mxu0 %v215
    %298 = vmatpush.bf16.msra.mxu0 %v211
    %299 = vmatpush.bf16.msra.mxu0 %v207
    %300 = vmatpush.bf16.msra.mxu0 %v203
    %301 = vmatpush.bf16.msra.mxu0 %v199
    %302 = vmatpush.bf16.msra.mxu0 %v195
    %303 = vmatmul.bf16.gmra.mxu0 %v53
    %v304 = vpop.f32.mrf.mxu0
    %v305 = vadd.f32 %v91, %v304
    %v306 = vpop.f32.mrf.mxu0
    %307 = vdwg.mxu0
    %v308 = vmul.f32 %v266, 0.5
    %v309 = vmul.f32 %v279, 0.5
    %v310 = vmul.f32 %v292, 0.5
    %v311 = vmul.f32 %v305, 0.5
    %v312 = vmul.f32 %v266, 0.70710677
    %v313 = vmul.f32 %v279, 0.70710677
    %v314 = vmul.f32 %v292, 0.70710677
    %v315 = vmul.f32 %v305, 0.70710677
    %v316 = vand.u32 2147483647, %v312
    %v317 = vand.u32 2147483647, %v313
    %v318 = vand.u32 2147483647, %v314
    %v319 = vand.u32 2147483647, %v315
    %v320 = vmul.f32 %v316, 0.3275911
    %v321 = vmul.f32 %v317, 0.3275911
    %v322 = vmul.f32 %v318, 0.3275911
    %v323 = vmul.f32 %v319, 0.3275911
    %v324 = vadd.f32 %v320, 1.0
    %v325 = vadd.f32 %v321, 1.0
    %v326 = vadd.f32 %v322, 1.0
    %v327 = vadd.f32 %v323, 1.0
    %v328 = vrcp.pop %v324
    %v329 = vrcp.pop %v325
    %v330 = vrcp.pop %v326
    %v331 = vrcp.pop %v327
    %v332 = vmul.f32 %v328, 1.0614054
    %v333 = vmul.f32 %v329, 1.0614054
    %v334 = vmul.f32 %v330, 1.0614054
    %v335 = vmul.f32 %v331, 1.0614054
    %v336 = vadd.f32 %v332, -1.4531521
    %v337 = vadd.f32 %v333, -1.4531521
    %v338 = vadd.f32 %v334, -1.4531521
    %v339 = vadd.f32 %v335, -1.4531521
    %v340 = vmul.f32 %v336, %v328
    %v341 = vmul.f32 %v337, %v329
    %v342 = vmul.f32 %v338, %v330
    %v343 = vmul.f32 %v339, %v331
    %v344 = vadd.f32 %v340, 1.4214138
    %v345 = vadd.f32 %v341, 1.4214138
    %v346 = vadd.f32 %v342, 1.4214138
    %v347 = vadd.f32 %v343, 1.4214138
    %v348 = vmul.f32 %v344, %v328
    %v349 = vmul.f32 %v345, %v329
    %v350 = vmul.f32 %v346, %v330
    %v351 = vmul.f32 %v347, %v331
    %v352 = vadd.f32 %v348, -0.28449672
    %v353 = vadd.f32 %v349, -0.28449672
    %v354 = vadd.f32 %v350, -0.28449672
    %v355 = vadd.f32 %v351, -0.28449672
    %v356 = vmul.f32 %v352, %v328
    %v357 = vmul.f32 %v353, %v329
    %v358 = vmul.f32 %v354, %v330
    %v359 = vmul.f32 %v355, %v331
    %v360 = vadd.f32 %v356, 0.2548296
    %v361 = vadd.f32 %v357, 0.2548296
    %v362 = vadd.f32 %v358, 0.2548296
    %v363 = vadd.f32 %v359, 0.2548296
    %v364 = vmul.f32 %v360, %v328
    %v365 = vmul.f32 %v361, %v329
    %v366 = vmul.f32 %v362, %v330
    %v367 = vmul.f32 %v363, %v331
    %v368 = vsub.f32 0.0, %v316
    %v369 = vsub.f32 0.0, %v317
    %v370 = vsub.f32 0.0, %v318
    %v371 = vsub.f32 0.0, %v319
    %v372 = vmul.f32 %v368, %v316
    %v373 = vmul.f32 %v369, %v317
    %v374 = vmul.f32 %v370, %v318
    %v375 = vmul.f32 %v371, %v319
    %v376 = vmul.f32 %v372, 1.442695
    %v377 = vpow.pop %v376
    %v378 = vmul.f32 %v373, 1.442695
    %v379 = vpow.pop %v378
    %v380 = vmul.f32 %v374, 1.442695
    %v381 = vpow.pop %v380
    %v382 = vmul.f32 %v375, 1.442695
    %v383 = vpow.pop %v382
    %v384 = vmul.f32 %v364, %v377
    %v385 = vmul.f32 %v365, %v379
    %v386 = vmul.f32 %v366, %v381
    %v387 = vmul.f32 %v367, %v383
    %v388 = vsub.f32 1.0, %v384
    %v389 = vsub.f32 1.0, %v385
    %v390 = vsub.f32 1.0, %v386
    %v391 = vsub.f32 1.0, %v387
    %vm392 = vcmp.ge.f32.partialorder %v312, 0.0
    %vm393 = vcmp.ge.f32.partialorder %v313, 0.0
    %vm394 = vcmp.ge.f32.partialorder %v314, 0.0
    %vm395 = vcmp.ge.f32.partialorder %v315, 0.0
    %v396 = vsub.f32 0.0, %v388
    %v397 = vsub.f32 0.0, %v389
    %v398 = vsub.f32 0.0, %v390
    %v399 = vsub.f32 0.0, %v391
    %v400 = vsel %vm392, %v388, %v396
    %v401 = vsel %vm393, %v389, %v397
    %v402 = vsel %vm394, %v390, %v398
    %v403 = vsel %vm395, %v391, %v399
    %v404 = vadd.f32 %v400, 1.0
    %v405 = vadd.f32 %v401, 1.0
    %v406 = vadd.f32 %v402, 1.0
    %v407 = vadd.f32 %v403, 1.0
    %v408 = vmul.f32 %v308, %v404
    %v409 = vmul.f32 %v309, %v405
    %v410 = vmul.f32 %v310, %v406
    %v411 = vmul.f32 %v311, %v407
    %v412 = vpack.c.bf16 %v408, %v408
    %v413 = vpack.c.bf16 %v409, %v409
    %v414 = vpack.c.bf16 %v410, %v410
    %v415 = vpack.c.bf16 %v411, %v411
    %v416 = vld [vmem:[#allocation4] sm:$0xf]
    %v417 = vld [vmem:[#allocation4 + $0x4] sm:$0xf]
    %v418 = vld [vmem:[#allocation4 + $0x8] sm:$0xf]
    %v419 = vld [vmem:[#allocation4 + $0xc] sm:$0xf]
    %v420 = vld [vmem:[#allocation4 + $0x10] sm:$0xf]
    %v421 = vld [vmem:[#allocation4 + $0x14] sm:$0xf]
    %v422 = vld [vmem:[#allocation4 + $0x18] sm:$0xf]
    %v423 = vld [vmem:[#allocation4 + $0x1c] sm:$0xf]
    %v424 = vld [vmem:[#allocation4 + $0x20] sm:$0xf]
    %v425 = vld [vmem:[#allocation4 + $0x24] sm:$0xf]
    %v426 = vld [vmem:[#allocation4 + $0x28] sm:$0xf]
    %v427 = vld [vmem:[#allocation4 + $0x2c] sm:$0xf]
    %v428 = vld [vmem:[#allocation4 + $0x30] sm:$0xf]
    %v429 = vld [vmem:[#allocation4 + $0x34] sm:$0xf]
    %v430 = vld [vmem:[#allocation4 + $0x38] sm:$0xf]
    %v431 = vld [vmem:[#allocation4 + $0x3c] sm:$0xf]
    %v432 = vld [vmem:[#allocation4 + $0x40] sm:$0xf]
    %v433 = vld [vmem:[#allocation4 + $0x44] sm:$0xf]
    %v434 = vld [vmem:[#allocation4 + $0x48] sm:$0xf]
    %v435 = vld [vmem:[#allocation4 + $0x4c] sm:$0xf]
    %v436 = vld [vmem:[#allocation4 + $0x50] sm:$0xf]
    %v437 = vld [vmem:[#allocation4 + $0x54] sm:$0xf]
    %v438 = vld [vmem:[#allocation4 + $0x58] sm:$0xf]
    %v439 = vld [vmem:[#allocation4 + $0x5c] sm:$0xf]
    %v440 = vld [vmem:[#allocation4 + $0x60] sm:$0xf]
    %v441 = vld [vmem:[#allocation4 + $0x64] sm:$0xf]
    %v442 = vld [vmem:[#allocation4 + $0x68] sm:$0xf]
    %v443 = vld [vmem:[#allocation4 + $0x6c] sm:$0xf]
    %v444 = vld [vmem:[#allocation4 + $0x70] sm:$0xf]
    %v445 = vld [vmem:[#allocation4 + $0x74] sm:$0xf]
    %v446 = vld [vmem:[#allocation4 + $0x78] sm:$0xf]
    %v447 = vld [vmem:[#allocation4 + $0x7c] sm:$0xf]
    %v448 = vld [vmem:[#allocation4 + $0x80] sm:$0xf]
    %v449 = vld [vmem:[#allocation4 + $0x84] sm:$0xf]
    %v450 = vld [vmem:[#allocation4 + $0x88] sm:$0xf]
    %v451 = vld [vmem:[#allocation4 + $0x8c] sm:$0xf]
    %v452 = vld [vmem:[#allocation4 + $0x90] sm:$0xf]
    %v453 = vld [vmem:[#allocation4 + $0x94] sm:$0xf]
    %v454 = vld [vmem:[#allocation4 + $0x98] sm:$0xf]
    %v455 = vld [vmem:[#allocation4 + $0x9c] sm:$0xf]
    %v456 = vld [vmem:[#allocation4 + $0xa0] sm:$0xf]
    %v457 = vld [vmem:[#allocation4 + $0xa4] sm:$0xf]
    %v458 = vld [vmem:[#allocation4 + $0xa8] sm:$0xf]
    %v459 = vld [vmem:[#allocation4 + $0xac] sm:$0xf]
    %v460 = vld [vmem:[#allocation4 + $0xb0] sm:$0xf]
    %v461 = vld [vmem:[#allocation4 + $0xb4] sm:$0xf]
    %v462 = vld [vmem:[#allocation4 + $0xb8] sm:$0xf]
    %v463 = vld [vmem:[#allocation4 + $0xbc] sm:$0xf]
    %v464 = vld [vmem:[#allocation4 + $0xc0] sm:$0xf]
    %v465 = vld [vmem:[#allocation4 + $0xc4] sm:$0xf]
    %v466 = vld [vmem:[#allocation4 + $0xc8] sm:$0xf]
    %v467 = vld [vmem:[#allocation4 + $0xcc] sm:$0xf]
    %v468 = vld [vmem:[#allocation4 + $0xd0] sm:$0xf]
    %v469 = vld [vmem:[#allocation4 + $0xd4] sm:$0xf]
    %v470 = vld [vmem:[#allocation4 + $0xd8] sm:$0xf]
    %v471 = vld [vmem:[#allocation4 + $0xdc] sm:$0xf]
    %v472 = vld [vmem:[#allocation4 + $0xe0] sm:$0xf]
    %v473 = vld [vmem:[#allocation4 + $0xe4] sm:$0xf]
    %v474 = vld [vmem:[#allocation4 + $0xe8] sm:$0xf]
    %v475 = vld [vmem:[#allocation4 + $0xec] sm:$0xf]
    %v476 = vld [vmem:[#allocation4 + $0xf0] sm:$0xf]
    %v477 = vld [vmem:[#allocation4 + $0xf4] sm:$0xf]
    %v478 = vld [vmem:[#allocation4 + $0xf8] sm:$0xf]
    %v479 = vld [vmem:[#allocation4 + $0xfc] sm:$0xf]
    %v480 = vld [vmem:[%s4] sm:$0x1]
    %v482 = vperm.slane %v480, 0
    %v548 = vunpack.c.l.b16 %v416
    %v549 = vunpack.c.l.b16 %v417
    %v550 = vunpack.c.l.b16 %v418
    %v551 = vunpack.c.l.b16 %v419
    %v552 = vunpack.c.l.b16 %v420
    %v553 = vunpack.c.l.b16 %v421
    %v554 = vunpack.c.l.b16 %v422
    %v555 = vunpack.c.l.b16 %v423
    %v556 = vunpack.c.l.b16 %v424
    %v557 = vunpack.c.l.b16 %v425
    %v558 = vunpack.c.l.b16 %v426
    %v559 = vunpack.c.l.b16 %v427
    %v560 = vunpack.c.l.b16 %v428
    %v561 = vunpack.c.l.b16 %v429
    %v562 = vunpack.c.l.b16 %v430
    %v563 = vunpack.c.l.b16 %v431
    %v564 = vunpack.c.l.b16 %v432
    %v565 = vunpack.c.l.b16 %v433
    %v566 = vunpack.c.l.b16 %v434
    %v567 = vunpack.c.l.b16 %v435
    %v568 = vunpack.c.l.b16 %v436
    %v569 = vunpack.c.l.b16 %v437
    %v570 = vunpack.c.l.b16 %v438
    %v571 = vunpack.c.l.b16 %v439
    %v572 = vunpack.c.l.b16 %v440
    %v573 = vunpack.c.l.b16 %v441
    %v574 = vunpack.c.l.b16 %v442
    %v575 = vunpack.c.l.b16 %v443
    %v576 = vunpack.c.l.b16 %v444
    %v577 = vunpack.c.l.b16 %v445
    %v578 = vunpack.c.l.b16 %v446
    %v579 = vunpack.c.l.b16 %v447
    %v580 = vunpack.c.l.b16 %v448
    %v581 = vunpack.c.l.b16 %v449
    %v582 = vunpack.c.l.b16 %v450
    %v583 = vunpack.c.l.b16 %v451
    %v584 = vunpack.c.l.b16 %v452
    %v585 = vunpack.c.l.b16 %v453
    %v586 = vunpack.c.l.b16 %v454
    %v587 = vunpack.c.l.b16 %v455
    %v588 = vunpack.c.l.b16 %v456
    %v589 = vunpack.c.l.b16 %v457
    %v590 = vunpack.c.l.b16 %v458
    %v591 = vunpack.c.l.b16 %v459
    %v592 = vunpack.c.l.b16 %v460
    %v593 = vunpack.c.l.b16 %v461
    %v594 = vunpack.c.l.b16 %v462
    %v595 = vunpack.c.l.b16 %v463
    %v596 = vunpack.c.l.b16 %v464
    %v597 = vunpack.c.l.b16 %v465
    %v598 = vunpack.c.l.b16 %v466
    %v599 = vunpack.c.l.b16 %v467
    %v600 = vunpack.c.l.b16 %v468
    %v601 = vunpack.c.l.b16 %v469
    %v602 = vunpack.c.l.b16 %v470
    %v603 = vunpack.c.l.b16 %v471
    %v604 = vunpack.c.l.b16 %v472
    %v605 = vunpack.c.l.b16 %v473
    %v606 = vunpack.c.l.b16 %v474
    %v607 = vunpack.c.l.b16 %v475
    %v608 = vunpack.c.l.b16 %v476
    %v609 = vunpack.c.l.b16 %v477
    %v610 = vunpack.c.l.b16 %v478
    %v611 = vunpack.c.l.b16 %v479
    %v612 = vpack.c.b16 %v549, %v548
    %v613 = vpack.c.b16 %v551, %v550
    %v614 = vpack.c.b16 %v553, %v552
    %v615 = vpack.c.b16 %v555, %v554
    %v616 = vpack.c.b16 %v557, %v556
    %v617 = vpack.c.b16 %v559, %v558
    %v618 = vpack.c.b16 %v561, %v560
    %v619 = vpack.c.b16 %v563, %v562
    %v620 = vpack.c.b16 %v565, %v564
    %v621 = vpack.c.b16 %v567, %v566
    %v622 = vpack.c.b16 %v569, %v568
    %v623 = vpack.c.b16 %v571, %v570
    %v624 = vpack.c.b16 %v573, %v572
    %v625 = vpack.c.b16 %v575, %v574
    %v626 = vpack.c.b16 %v577, %v576
    %v627 = vpack.c.b16 %v579, %v578
    %v628 = vpack.c.b16 %v581, %v580
    %v629 = vpack.c.b16 %v583, %v582
    %v630 = vpack.c.b16 %v585, %v584
    %v631 = vpack.c.b16 %v587, %v586
    %v632 = vpack.c.b16 %v589, %v588
    %v633 = vpack.c.b16 %v591, %v590
    %v634 = vpack.c.b16 %v593, %v592
    %v635 = vpack.c.b16 %v595, %v594
    %v636 = vpack.c.b16 %v597, %v596
    %v637 = vpack.c.b16 %v599, %v598
    %v638 = vpack.c.b16 %v601, %v600
    %v639 = vpack.c.b16 %v603, %v602
    %v640 = vpack.c.b16 %v605, %v604
    %v641 = vpack.c.b16 %v607, %v606
    %v642 = vpack.c.b16 %v609, %v608
    %v643 = vpack.c.b16 %v611, %v610
    %676 = vmatpush.bf16.msra.mxu0 %v619
    %677 = vmatpush.bf16.msra.mxu0 %v618
    %678 = vmatpush.bf16.msra.mxu0 %v617
    %679 = vmatpush.bf16.msra.mxu0 %v616
    %680 = vmatpush.bf16.msra.mxu0 %v615
    %681 = vmatpush.bf16.msra.mxu0 %v614
    %682 = vmatpush.bf16.msra.mxu0 %v613
    %683 = vmatpush.bf16.msra.mxu0 %v612
    %684 = vmatmul.bf16.gmra.mxu0 %v412
    %v685 = vpop.f32.mrf.mxu0
    %v686 = vadd.f32 %v482, %v685
    %v687 = vpop.f32.mrf.mxu0
    %688 = vdwg.mxu0
    %689 = vmatpush.bf16.msra.mxu0 %v627
    %690 = vmatpush.bf16.msra.mxu0 %v626
    %691 = vmatpush.bf16.msra.mxu0 %v625
    %692 = vmatpush.bf16.msra.mxu0 %v624
    %693 = vmatpush.bf16.msra.mxu0 %v623
    %694 = vmatpush.bf16.msra.mxu0 %v622
    %695 = vmatpush.bf16.msra.mxu0 %v621
    %696 = vmatpush.bf16.msra.mxu0 %v620
    %697 = vmatmul.bf16.gmra.mxu0 %v413
    %v698 = vpop.f32.mrf.mxu0
    %v699 = vadd.f32 %v686, %v698
    %v700 = vpop.f32.mrf.mxu0
    %701 = vdwg.mxu0
    %702 = vmatpush.bf16.msra.mxu0 %v635
    %703 = vmatpush.bf16.msra.mxu0 %v634
    %704 = vmatpush.bf16.msra.mxu0 %v633
    %705 = vmatpush.bf16.msra.mxu0 %v632
    %706 = vmatpush.bf16.msra.mxu0 %v631
    %707 = vmatpush.bf16.msra.mxu0 %v630
    %708 = vmatpush.bf16.msra.mxu0 %v629
    %709 = vmatpush.bf16.msra.mxu0 %v628
    %710 = vmatmul.bf16.gmra.mxu0 %v414
    %v711 = vpop.f32.mrf.mxu0
    %v712 = vadd.f32 %v699, %v711
    %v713 = vpop.f32.mrf.mxu0
    %714 = vdwg.mxu0
    %715 = vmatpush.bf16.msra.mxu0 %v643
    %716 = vmatpush.bf16.msra.mxu0 %v642
    %717 = vmatpush.bf16.msra.mxu0 %v641
    %718 = vmatpush.bf16.msra.mxu0 %v640
    %719 = vmatpush.bf16.msra.mxu0 %v639
    %720 = vmatpush.bf16.msra.mxu0 %v638
    %721 = vmatpush.bf16.msra.mxu0 %v637
    %722 = vmatpush.bf16.msra.mxu0 %v636
    %723 = vmatmul.bf16.gmra.mxu0 %v415
    %v724 = vpop.f32.mrf.mxu0
    %v725 = vadd.f32 %v712, %v724
    %v726 = vpop.f32.mrf.mxu0
    %727 = vdwg.mxu0
    %728 = vst [vmem:[%s5] sm:$0xff] %v725
    // Predicated region
    $region30: #{mlp_forward.1} parent=1 // pred_check
      _
    $region31: #{mlp_forward.1} parent=1 // pred_check_branch
      %730 = sbr.rel (0) target = $region33
    $region32: #{mlp_forward.1} parent=1 // pred_region
      _
    $region33: #{mlp_forward.1} parent=1 // pred_fallthru
      _
    // Predicated region
    $region34: #{mlp_forward.1} parent=1 // pred_check
      _
    $region35: #{mlp_forward.1} parent=1 // pred_check_branch
      %732 = sbr.rel (0) target = $region37
    $region36: #{mlp_forward.1} parent=1 // pred_region
      _
    $region37: #{mlp_forward.1} parent=1 // pred_fallthru
      _
    %733 = vsyncpa [#allocation3], 1
    %734 = vsyncpa [#allocation5], 1

</llo_original>
